<compile_context>
chip_gen: v7x
topology: tpu7x:2x2x1
jax: 0.10.0
libtpu: 0.0.40
codegen_flags: <defaults>
</compile_context>

<pallas_src>
import jax
import jax.numpy as jnp
from jax.experimental import pallas as pl
from jax.experimental.pallas import tpu as pltpu


STATE_SIZE = 24
ACTION_SIZE = 2
EMBED_DIM = 128
OUT_PAD = 8          # layer-3 weight padded to 8 output features (lowering hedge)
LEAKY_SLOPE = 0.1


def _round_up(x, m):
    return ((x + m - 1) // m) * m


def _actor_kernel(x_ref, w1_ref, b1_ref, w2_ref, b2_ref, w3_ref, b3_ref, o_ref):
    # Layer 1: Linear + LeakyReLU(0.1).  bf16 operands -> f32 accumulation.
    x = x_ref[...]                                              # (tile, 24) bf16
    h = jnp.dot(x, w1_ref[...], preferred_element_type=jnp.float32)
    h = h + b1_ref[...]                                         # (tile,128)+(1,128)
    h = jnp.where(h > 0, h, LEAKY_SLOPE * h)

    # Layer 2: Linear + LeakyReLU(0.1)
    h = jnp.dot(h.astype(jnp.bfloat16), w2_ref[...],
                preferred_element_type=jnp.float32)
    h = h + b2_ref[...]
    h = jnp.where(h > 0, h, LEAKY_SLOPE * h)

    # Layer 3: Linear (8 padded output features) -> keep only the real action
    # columns for bias + tanh + store (narrow, masked store to HBM).
    out = jnp.dot(h.astype(jnp.bfloat16), w3_ref[...],
                  preferred_element_type=jnp.float32)           # (tile, 8)
    out = out[:, :ACTION_SIZE] + b3_ref[...]                    # (tile, 2)
    o_ref[...] = jnp.tanh(out)


def prepare_params(params):
    """One-time preprocessing of the f32 params (bf16 casts, layer-3 padding).

    Call once and reuse; keeps per-forward HLO overhead out of the hot path.
    """
    w1, b1, w2, b2, w3, b3 = params
    w1b = w1.astype(jnp.bfloat16)                               # (24, 128)
    w2b = w2.astype(jnp.bfloat16)                               # (128, 128)
    w3p = jnp.zeros((EMBED_DIM, OUT_PAD), jnp.bfloat16).at[:, :ACTION_SIZE].set(
        w3.astype(jnp.bfloat16))                                # (128, 8)
    b1f = b1.reshape(1, EMBED_DIM).astype(jnp.float32)
    b2f = b2.reshape(1, EMBED_DIM).astype(jnp.float32)
    b3f = b3.reshape(1, ACTION_SIZE).astype(jnp.float32)
    return (w1b, b1f, w2b, b2f, w3p, b3f)


def actor_forward(states, prepared_params, tile_b=2048):
    """states: (B, STATE_SIZE) -> tanh(MLP(states)) of shape (B, ACTION_SIZE),
    then squeezed (mirrors the PyTorch .squeeze())."""
    w1b, b1f, w2b, b2f, w3p, b3f = prepared_params
    B = states.shape[0]

    # Batch tile: multiple of 16 (bf16 sublane packing), capped at tile_b.
    tile = min(tile_b, _round_up(max(B, 1), 16))
    padded_b = _round_up(B, tile)
    # v7x megacore: make sure there are >= 2 grid steps when the batch allows,
    # so ("parallel",) actually spreads work over both TensorCores.
    if padded_b == tile and tile >= 32:
        tile = _round_up(tile // 2, 16)
        padded_b = _round_up(B, tile)
    num_tiles = padded_b // tile

    # bf16 input (halves the dominant HBM read); pad rows to the tile multiple.
    x = states.astype(jnp.bfloat16)
    if padded_b != B:
        x = jnp.pad(x, ((0, padded_b - B), (0, 0)))

    const = lambda i: (0, 0)       # weights/biases: same block every grid step

    flops = 2 * padded_b * (STATE_SIZE * EMBED_DIM
                            + EMBED_DIM * EMBED_DIM
                            + EMBED_DIM * OUT_PAD)
    param_bytes = sum(int(p.size) * p.dtype.itemsize for p in prepared_params)
    bytes_accessed = (padded_b * STATE_SIZE * 2          # bf16 input read
                      + padded_b * ACTION_SIZE * 4       # f32 narrow output
                      + param_bytes)

    out_padded = pl.pallas_call(
        _actor_kernel,
        out_shape=jax.ShapeDtypeStruct((padded_b, ACTION_SIZE), jnp.float32),
        grid=(num_tiles,),
        in_specs=[
            pl.BlockSpec((tile, STATE_SIZE), lambda i: (i, 0)),
            pl.BlockSpec((STATE_SIZE, EMBED_DIM), const),
            pl.BlockSpec((1, EMBED_DIM), const),
            pl.BlockSpec((EMBED_DIM, EMBED_DIM), const),
            pl.BlockSpec((1, EMBED_DIM), const),
            pl.BlockSpec((EMBED_DIM, OUT_PAD), const),
            pl.BlockSpec((1, ACTION_SIZE), const),
        ],
        out_specs=pl.BlockSpec((tile, ACTION_SIZE), lambda i: (i, 0)),
        compiler_params=pltpu.CompilerParams(
            dimension_semantics=("parallel",),
            vmem_limit_bytes=32 * 1024 * 1024),
        cost_estimate=pl.CostEstimate(
            flops=flops,
            transcendentals=padded_b * ACTION_SIZE,
            bytes_accessed=bytes_accessed),
    )(x, w1b, b1f, w2b, b2f, w3p, b3f)

    out = out_padded[:B] if padded_b != B else out_padded
    # mirrors .squeeze() in the PyTorch forward (drops size-1 dims, e.g. B == 1)
    return jnp.squeeze(out)


def init_params(key):
    """Deterministic init mimicking torch.nn.Linear default U(-1/sqrt(fan_in), 1/sqrt(fan_in))."""
    def linear(k, fan_in, fan_out):
        kw, kb = jax.random.split(k)
        bound = 1.0 / jnp.sqrt(fan_in)
        w = jax.random.uniform(kw, (fan_in, fan_out), jnp.float32, -bound, bound)
        b = jax.random.uniform(kb, (1, fan_out), jnp.float32, -bound, bound)
        return w, b

    k1, k2, k3 = jax.random.split(key, 3)
    w1, b1 = linear(k1, STATE_SIZE, EMBED_DIM)
    w2, b2 = linear(k2, EMBED_DIM, EMBED_DIM)
    w3, b3 = linear(k3, EMBED_DIM, ACTION_SIZE)
    return (w1, b1, w2, b2, w3, b3)


def _reference_forward(states, params):
    """Pure-f32 reference (kernel uses bf16 matmul operands -> loose tolerance)."""
    w1, b1, w2, b2, w3, b3 = params
    h = states @ w1 + b1
    h = jnp.where(h > 0, h, LEAKY_SLOPE * h)
    h = h @ w2 + b2
    h = jnp.where(h > 0, h, LEAKY_SLOPE * h)
    return jnp.squeeze(jnp.tanh(h @ w3 + b3))


if __name__ == "__main__":
    key = jax.random.PRNGKey(0)
    k_params, k_states = jax.random.split(key)

    params = init_params(k_params)
    prepared = prepare_params(params)          # one-time weight preprocessing
    states = jax.random.normal(k_states, (8, STATE_SIZE), jnp.float32)

    actions = jax.block_until_ready(actor_forward(states, prepared))
    ref = _reference_forward(states, params)

    assert actions.shape == (8, ACTION_SIZE), actions.shape
    # bf16 matmul operands / bf16 input (f32 accumulation) vs. pure-f32 reference
    assert jnp.allclose(actions, ref, atol=2e-2), "mismatch vs. reference"
    print("KERNEL_OK")
</pallas_src>

<mosaic_0001>
module attributes {stable_mosaic.version = 11 : i64} {
  func.func @_actor_kernel(%arg0: i32, %arg1: memref<16x24xbf16, #tpu.memory_space<vmem>>, %arg2: memref<24x128xbf16, #tpu.memory_space<vmem>>, %arg3: memref<1x128xf32, #tpu.memory_space<vmem>>, %arg4: memref<128x128xbf16, #tpu.memory_space<vmem>>, %arg5: memref<1x128xf32, #tpu.memory_space<vmem>>, %arg6: memref<128x8xbf16, #tpu.memory_space<vmem>>, %arg7: memref<1x2xf32, #tpu.memory_space<vmem>>, %arg8: memref<16x2xf32, #tpu.memory_space<vmem>>) attributes {dimension_semantics = [#tpu.dimension_semantics<parallel>], iteration_bounds = array<i64: 1>, scalar_prefetch = 0 : i64, scratch_operands = 0 : i64, tpu.core_type = #tpu.core_type<tc>, window_params = [{transform_indices = @transform_0, window_bounds = array<i64: 16, 24>}, {pipeline_mode = #tpu.pipeline_mode<synchronous>, transform_indices = @transform_1, window_bounds = array<i64: 24, 128>}, {pipeline_mode = #tpu.pipeline_mode<synchronous>, transform_indices = @transform_2, window_bounds = array<i64: 1, 128>}, {pipeline_mode = #tpu.pipeline_mode<synchronous>, transform_indices = @transform_3, window_bounds = array<i64: 128, 128>}, {pipeline_mode = #tpu.pipeline_mode<synchronous>, transform_indices = @transform_4, window_bounds = array<i64: 1, 128>}, {pipeline_mode = #tpu.pipeline_mode<synchronous>, transform_indices = @transform_5, window_bounds = array<i64: 128, 8>}, {pipeline_mode = #tpu.pipeline_mode<synchronous>, transform_indices = @transform_6, window_bounds = array<i64: 1, 2>}, {transform_indices = @transform_7, window_bounds = array<i64: 16, 2>}]} {
    %c0 = arith.constant 0 : index
    %c0_0 = arith.constant 0 : index
    %0 = vector.load %arg1[%c0, %c0_0] : memref<16x24xbf16, #tpu.memory_space<vmem>>, vector<16x24xbf16>
    %c0_1 = arith.constant 0 : index
    %c0_2 = arith.constant 0 : index
    %1 = vector.load %arg2[%c0_1, %c0_2] : memref<24x128xbf16, #tpu.memory_space<vmem>>, vector<24x128xbf16>
    %cst = arith.constant dense<0.000000e+00> : vector<16x128xf32>
    %2 = tpu.matmul %0, %1, %cst {dimension_numbers = #tpu.dot_dimension_numbers<[1], [0], [0], [1], [0, 0, 1, 1], [], []>} : vector<16x24xbf16>, vector<24x128xbf16>, vector<16x128xf32> -> vector<16x128xf32>
    %c0_3 = arith.constant 0 : index
    %c0_4 = arith.constant 0 : index
    %3 = vector.load %arg3[%c0_3, %c0_4] : memref<1x128xf32, #tpu.memory_space<vmem>>, vector<1x128xf32>
    %4 = vector.broadcast %3 : vector<1x128xf32> to vector<16x128xf32>
    %5 = arith.addf %2, %4 : vector<16x128xf32>
    %cst_5 = arith.constant 0.000000e+00 : f32
    %6 = vector.broadcast %cst_5 : f32 to vector<16x128xf32>
    %7 = arith.cmpf ogt, %5, %6 : vector<16x128xf32>
    %cst_6 = arith.constant 1.000000e-01 : f32
    %8 = vector.broadcast %cst_6 : f32 to vector<16x128xf32>
    %9 = arith.mulf %8, %5 : vector<16x128xf32>
    %10 = arith.select %7, %5, %9 : vector<16x128xi1>, vector<16x128xf32>
    %11 = arith.truncf %10 : vector<16x128xf32> to vector<16x128xbf16>
    %c0_7 = arith.constant 0 : index
    %c0_8 = arith.constant 0 : index
    %12 = vector.load %arg4[%c0_7, %c0_8] : memref<128x128xbf16, #tpu.memory_space<vmem>>, vector<128x128xbf16>
    %cst_9 = arith.constant dense<0.000000e+00> : vector<16x128xf32>
    %13 = tpu.matmul %11, %12, %cst_9 {dimension_numbers = #tpu.dot_dimension_numbers<[1], [0], [0], [1], [0, 0, 1, 1], [], []>} : vector<16x128xbf16>, vector<128x128xbf16>, vector<16x128xf32> -> vector<16x128xf32>
    %c0_10 = arith.constant 0 : index
    %c0_11 = arith.constant 0 : index
    %14 = vector.load %arg5[%c0_10, %c0_11] : memref<1x128xf32, #tpu.memory_space<vmem>>, vector<1x128xf32>
    %15 = vector.broadcast %14 : vector<1x128xf32> to vector<16x128xf32>
    %16 = arith.addf %13, %15 : vector<16x128xf32>
    %cst_12 = arith.constant 0.000000e+00 : f32
    %17 = vector.broadcast %cst_12 : f32 to vector<16x128xf32>
    %18 = arith.cmpf ogt, %16, %17 : vector<16x128xf32>
    %cst_13 = arith.constant 1.000000e-01 : f32
    %19 = vector.broadcast %cst_13 : f32 to vector<16x128xf32>
    %20 = arith.mulf %19, %16 : vector<16x128xf32>
    %21 = arith.select %18, %16, %20 : vector<16x128xi1>, vector<16x128xf32>
    %22 = arith.truncf %21 : vector<16x128xf32> to vector<16x128xbf16>
    %c0_14 = arith.constant 0 : index
    %c0_15 = arith.constant 0 : index
    %23 = vector.load %arg6[%c0_14, %c0_15] : memref<128x8xbf16, #tpu.memory_space<vmem>>, vector<128x8xbf16>
    %cst_16 = arith.constant dense<0.000000e+00> : vector<16x8xf32>
    %24 = tpu.matmul %22, %23, %cst_16 {dimension_numbers = #tpu.dot_dimension_numbers<[1], [0], [0], [1], [0, 0, 1, 1], [], []>} : vector<16x128xbf16>, vector<128x8xbf16>, vector<16x8xf32> -> vector<16x8xf32>
    %25 = vector.extract_strided_slice %24 {offsets = [0, 0], sizes = [16, 2], strides = [1, 1]} : vector<16x8xf32> to vector<16x2xf32>
    %c0_17 = arith.constant 0 : index
    %c0_18 = arith.constant 0 : index
    %26 = vector.load %arg7[%c0_17, %c0_18] : memref<1x2xf32, #tpu.memory_space<vmem>>, vector<1x2xf32>
    %27 = vector.broadcast %26 : vector<1x2xf32> to vector<16x2xf32>
    %28 = arith.addf %25, %27 : vector<16x2xf32>
    %29 = math.tanh %28 : vector<16x2xf32>
    %c0_19 = arith.constant 0 : index
    %c0_20 = arith.constant 0 : index
    %30 = vector.load %arg8[%c0_19, %c0_20] : memref<16x2xf32, #tpu.memory_space<vmem>>, vector<16x2xf32>
    tpu.vector_store %arg8[%c0_19, %c0_20], %29 {strides = array<i32>} : memref<16x2xf32, #tpu.memory_space<vmem>>, vector<16x2xf32>,
    return
  }
  func.func @transform_0(%arg0: i32) -> (i32, i32) {
    %c0_i32 = arith.constant 0 : i32
    %c0_i32_0 = arith.constant 0 : i32
    return %arg0, %c0_i32 : i32, i32
  }
  func.func @transform_1(%arg0: i32) -> (i32, i32) {
    %c0_i32 = arith.constant 0 : i32
    %c0_i32_0 = arith.constant 0 : i32
    %c0_i32_1 = arith.constant 0 : i32
    return %c0_i32, %c0_i32_0 : i32, i32
  }
  func.func @transform_2(%arg0: i32) -> (i32, i32) {
    %c0_i32 = arith.constant 0 : i32
    %c0_i32_0 = arith.constant 0 : i32
    %c0_i32_1 = arith.constant 0 : i32
    return %c0_i32, %c0_i32_0 : i32, i32
  }
  func.func @transform_3(%arg0: i32) -> (i32, i32) {
    %c0_i32 = arith.constant 0 : i32
    %c0_i32_0 = arith.constant 0 : i32
    %c0_i32_1 = arith.constant 0 : i32
    return %c0_i32, %c0_i32_0 : i32, i32
  }
  func.func @transform_4(%arg0: i32) -> (i32, i32) {
    %c0_i32 = arith.constant 0 : i32
    %c0_i32_0 = arith.constant 0 : i32
    %c0_i32_1 = arith.constant 0 : i32
    return %c0_i32, %c0_i32_0 : i32, i32
  }
  func.func @transform_5(%arg0: i32) -> (i32, i32) {
    %c0_i32 = arith.constant 0 : i32
    %c0_i32_0 = arith.constant 0 : i32
    %c0_i32_1 = arith.constant 0 : i32
    return %c0_i32, %c0_i32_0 : i32, i32
  }
  func.func @transform_6(%arg0: i32) -> (i32, i32) {
    %c0_i32 = arith.constant 0 : i32
    %c0_i32_0 = arith.constant 0 : i32
    %c0_i32_1 = arith.constant 0 : i32
    return %c0_i32, %c0_i32_0 : i32, i32
  }
  func.func @transform_7(%arg0: i32) -> (i32, i32) {
    %c0_i32 = arith.constant 0 : i32
    %c0_i32_0 = arith.constant 0 : i32
    return %arg0, %c0_i32 : i32, i32
  }
}

</mosaic_0001>

<llo_original>
// kernel: tpu_custom_call.1
$region0: #{tpu_custom_call.1}
  #allocation0 [shape = 'u32[]', space=smem, size = 0x4, offset = 0x4, fixed_abs, tag = 'smem constant byte address 0x4 - core index']
  #allocation1 [shape = 'u32[144,128]{1,0:T(1,128)}', space=vmem, size = 0x12000, scoped, tag = 'internal scratch']
  %s0 = inlined_call_operand.hbm [shape: bf16[16,24], index: 0, kind: input, shape index: {}]
  %s1 = inlined_call_operand.vmem [shape: bf16[24,128], index: 1, kind: input, shape index: {}]
  %s2 = inlined_call_operand.vmem [shape: f32[1,128], index: 2, kind: input, shape index: {}]
  %s3 = inlined_call_operand.vmem [shape: bf16[128,128], index: 3, kind: input, shape index: {}]
  %s4 = inlined_call_operand.vmem [shape: f32[1,128], index: 4, kind: input, shape index: {}]
  %s5 = inlined_call_operand.vmem [shape: bf16[128,8], index: 5, kind: input, shape index: {}]
  %s6 = inlined_call_operand.vmem [shape: f32[1,2], index: 6, kind: input, shape index: {}]
  %s7 = inlined_call_operand.vmem [shape: f32[16,2], index: 7, kind: output, shape index: {}]
  %s8 = sld [smem:[#allocation0]]
  $region42: #{tpu_custom_call.1} parent=0
    _
  %s10 = ssub.s32 1, %s8
  %s11 = scalar_select 0, %s10, %s8
  $region1: #{tpu_custom_call.1} parent=0
    #allocation2 [shape = 'u8[4096]{0}', space=vmem, size = 0x1000, scoped, tag = 'input window, operand 0, single buffered']
    #allocation3 [shape = 's32[1]{0}', space=sflag, size = 0x4, scoped, tag = 'scoped memory for tpu_custom_call.1']
    %12 = vsyncpa [#allocation3], 0
    // Predicated region
    $region2: #{tpu_custom_call.1} parent=1 // pred_check
      _
    $region3: #{tpu_custom_call.1} parent=1 // pred_check_branch
      %14 = sbr.rel (0) target = $region5
    $region4: #{tpu_custom_call.1} parent=1 // pred_region
      %s16 = ssub.s32 128, 128
      %17 = vsyncadd [#allocation3], %s16
      %s18 = sshll.u32 [#allocation2], 4
      %s19 = int_to_ptr.vmem [resolvable:$true] %s18
      %24 = dma.hbm_to_vmem [thread:$0]  %s0, 128, %s19, [#allocation3], 64, 64, 4
    $region5: #{tpu_custom_call.1} parent=1 // pred_fallthru
      _
    // Predicated region
    $region6: #{tpu_custom_call.1} parent=1 // pred_check
      _
    $region7: #{tpu_custom_call.1} parent=1 // pred_check_branch
      %26 = sbr.rel (0) target = $region9
    $region8: #{tpu_custom_call.1} parent=1 // pred_region
      _
    $region9: #{tpu_custom_call.1} parent=1 // pred_fallthru
      _
    // Predicated region
    $region10: #{tpu_custom_call.1} parent=1 // pred_check
      _
    $region11: #{tpu_custom_call.1} parent=1 // pred_check_branch
      %28 = sbr.rel (0) target = $region13
    $region12: #{tpu_custom_call.1} parent=1 // pred_region
      _
    $region13: #{tpu_custom_call.1} parent=1 // pred_fallthru
      _
    // Predicated region
    $region14: #{tpu_custom_call.1} parent=1 // pred_check
      _
    $region15: #{tpu_custom_call.1} parent=1 // pred_check_branch
      %30 = sbr.rel (0) target = $region17
    $region16: #{tpu_custom_call.1} parent=1 // pred_region
      _
    $region17: #{tpu_custom_call.1} parent=1 // pred_fallthru
      _
    // Predicated region
    $region18: #{tpu_custom_call.1} parent=1 // pred_check
      _
    $region19: #{tpu_custom_call.1} parent=1 // pred_check_branch
      %32 = sbr.rel (0) target = $region21
    $region20: #{tpu_custom_call.1} parent=1 // pred_region
      _
    $region21: #{tpu_custom_call.1} parent=1 // pred_fallthru
      _
    // Predicated region
    $region22: #{tpu_custom_call.1} parent=1 // pred_check
      _
    $region23: #{tpu_custom_call.1} parent=1 // pred_check_branch
      %34 = sbr.rel (0) target = $region25
    $region24: #{tpu_custom_call.1} parent=1 // pred_region
      _
    $region25: #{tpu_custom_call.1} parent=1 // pred_fallthru
      _
    // Predicated region
    $region26: #{tpu_custom_call.1} parent=1 // pred_check
      _
    $region27: #{tpu_custom_call.1} parent=1 // pred_check_branch
      %36 = sbr.rel (0) target = $region29
    $region28: #{tpu_custom_call.1} parent=1 // pred_region
      _
    $region29: #{tpu_custom_call.1} parent=1 // pred_fallthru
      _
    // Predicated region
    $region30: #{tpu_custom_call.1} parent=1 // pred_check
      _
    $region31: #{tpu_custom_call.1} parent=1 // pred_check_branch
      %38 = sbr.rel (0) target = $region33
    $region32: #{tpu_custom_call.1} parent=1 // pred_region
      %39 = dma.done [#allocation3], 128
    $region33: #{tpu_custom_call.1} parent=1 // pred_fallthru
      _
    %v41 = vld [vmem:[#allocation2] sm:$0xf]
    %v42 = vld [vmem:[#allocation2 + $0x4] sm:$0xf]
    %v43 = vld [vmem:[%s1] sm:$0xf]
    %v44 = vld [vmem:[%s1 + $0x4] sm:$0xf]
    %v45 = vld [vmem:[%s1 + $0x8] sm:$0xf]
    %v46 = vld [vmem:[%s2] sm:$0x1]
    %v48 = vlaneseq
    %v49 = vshrl.u32 %v48, 7
    %v50 = vsub.s32 0, %v49
    %v51 = vrot.slane %v46, %v50
    %v55 = vunpack.c.l.b16 %v41
    %v56 = vunpack.c.l.b16 %v42
    %v57 = vpack.c.b16 %v56, %v55
    %v61 = vunpack.c.l.b16 %v43
    %v62 = vunpack.c.l.b16 %v44
    %v63 = vunpack.c.l.b16 %v45
    %v64 = vpack.c.b16 %v62, %v61
    %v65 = vpack.c.b16 %v63, %v63
    %vm67 = vcmask 195584
    %v69 = vsel %vm67, %v57, 0
    %vm71 = vcmask 1043456
    %v73 = vsel %vm71, %v65, 0
    %75 = vmatprep.subr.bf16.mxu0 0
    %76 = vmatpush1.bf16.msra.mxu0 %v64
    %77 = vmatprep.subr.bf16.mxu0 0
    %78 = vmatpush1.bf16.msra.mxu0 %v73
    %79 = vmatprep.subr.bf16.mxu0 0
    %80 = vmatpush1.bf16.msra.mxu0 0
    %81 = vmatprep.subr.bf16.mxu0 0
    %82 = vmatpush1.bf16.msra.mxu0 0
    %83 = vmatprep.subr.bf16.mxu0 0
    %84 = vmatpush1.bf16.msra.mxu0 0
    %85 = vmatprep.subr.bf16.mxu0 0
    %86 = vmatpush1.bf16.msra.mxu0 0
    %87 = vmatprep.subr.bf16.mxu0 0
    %88 = vmatpush1.bf16.msra.mxu0 0
    %89 = vmatprep.subr.bf16.mxu0 0
    %90 = vmatpush1.bf16.msra.mxu0 0
    %91 = vmatprep.subr.bf16.mxu0 0
    %92 = vmatpush1.bf16.msra.mxu0 0
    %93 = vmatprep.subr.bf16.mxu0 0
    %94 = vmatpush1.bf16.msra.mxu0 0
    %95 = vmatprep.subr.bf16.mxu0 0
    %96 = vmatpush1.bf16.msra.mxu0 0
    %97 = vmatprep.subr.bf16.mxu0 0
    %98 = vmatpush1.bf16.msra.mxu0 0
    %99 = vmatprep.subr.bf16.mxu0 0
    %100 = vmatpush1.bf16.msra.mxu0 0
    %101 = vmatprep.subr.bf16.mxu0 0
    %102 = vmatpush1.bf16.msra.mxu0 0
    %103 = vmatprep.subr.bf16.mxu0 0
    %104 = vmatpush1.bf16.msra.mxu0 0
    %105 = vmatprep.subr.bf16.mxu0 0
    %106 = vmatpush1.bf16.msra.mxu0 0
    %107 = vmatprep.mubr.bf16.mxu0 0
    %108 = vmatmul.mubr.bf16.gmra.mrb[0].mxu0 %v69
    %v109 = vpop.f32.mrb[0].mxu0
    %v110 = vadd.f32 %v51, %v109
    %v111 = vpop.f32.mrb[0].mxu0
    %v112 = vpop.f32.mrb[0].mxu0
    %v113 = vadd.f32 %v51, %v112
    %v114 = vpop.f32.mrb[0].mxu0
    %115 = vdwg.mxu0
    %vm116 = vcmp.gt.f32.partialorder %v110, 0.0
    %vm117 = vcmp.gt.f32.partialorder %v113, 0.0
    %v118 = vmul.f32 %v110, 0.1
    %v119 = vmul.f32 %v113, 0.1
    %v120 = vsel %vm116, %v110, %v118
    %v121 = vsel %vm117, %v113, %v119
    %v122 = vpack.c.bf16 %v121, %v120
    %v123 = vld [vmem:[%s3] sm:$0xf]
    %v124 = vld [vmem:[%s3 + $0x4] sm:$0xf]
    %v125 = vld [vmem:[%s3 + $0x8] sm:$0xf]
    %v126 = vld [vmem:[%s3 + $0xc] sm:$0xf]
    %v127 = vld [vmem:[%s3 + $0x10] sm:$0xf]
    %v128 = vld [vmem:[%s3 + $0x14] sm:$0xf]
    %v129 = vld [vmem:[%s3 + $0x18] sm:$0xf]
    %v130 = vld [vmem:[%s3 + $0x1c] sm:$0xf]
    %v131 = vld [vmem:[%s3 + $0x20] sm:$0xf]
    %v132 = vld [vmem:[%s3 + $0x24] sm:$0xf]
    %v133 = vld [vmem:[%s3 + $0x28] sm:$0xf]
    %v134 = vld [vmem:[%s3 + $0x2c] sm:$0xf]
    %v135 = vld [vmem:[%s3 + $0x30] sm:$0xf]
    %v136 = vld [vmem:[%s3 + $0x34] sm:$0xf]
    %v137 = vld [vmem:[%s3 + $0x38] sm:$0xf]
    %v138 = vld [vmem:[%s3 + $0x3c] sm:$0xf]
    %v139 = vld [vmem:[%s4] sm:$0x1]
    %v141 = vlaneseq
    %v142 = vshrl.u32 %v141, 7
    %v143 = vsub.s32 0, %v142
    %v144 = vrot.slane %v139, %v143
    %v162 = vunpack.c.l.b16 %v123
    %v163 = vunpack.c.l.b16 %v124
    %v164 = vunpack.c.l.b16 %v125
    %v165 = vunpack.c.l.b16 %v126
    %v166 = vunpack.c.l.b16 %v127
    %v167 = vunpack.c.l.b16 %v128
    %v168 = vunpack.c.l.b16 %v129
    %v169 = vunpack.c.l.b16 %v130
    %v170 = vunpack.c.l.b16 %v131
    %v171 = vunpack.c.l.b16 %v132
    %v172 = vunpack.c.l.b16 %v133
    %v173 = vunpack.c.l.b16 %v134
    %v174 = vunpack.c.l.b16 %v135
    %v175 = vunpack.c.l.b16 %v136
    %v176 = vunpack.c.l.b16 %v137
    %v177 = vunpack.c.l.b16 %v138
    %v178 = vpack.c.b16 %v163, %v162
    %v179 = vpack.c.b16 %v165, %v164
    %v180 = vpack.c.b16 %v167, %v166
    %v181 = vpack.c.b16 %v169, %v168
    %v182 = vpack.c.b16 %v171, %v170
    %v183 = vpack.c.b16 %v173, %v172
    %v184 = vpack.c.b16 %v175, %v174
    %v185 = vpack.c.b16 %v177, %v176
    %194 = vmatprep.subr.bf16.mxu0 0
    %195 = vmatpush1.bf16.msra.mxu0 %v178
    %196 = vmatprep.subr.bf16.mxu0 0
    %197 = vmatpush1.bf16.msra.mxu0 %v179
    %198 = vmatprep.subr.bf16.mxu0 0
    %199 = vmatpush1.bf16.msra.mxu0 %v180
    %200 = vmatprep.subr.bf16.mxu0 0
    %201 = vmatpush1.bf16.msra.mxu0 %v181
    %202 = vmatprep.subr.bf16.mxu0 0
    %203 = vmatpush1.bf16.msra.mxu0 %v182
    %204 = vmatprep.subr.bf16.mxu0 0
    %205 = vmatpush1.bf16.msra.mxu0 %v183
    %206 = vmatprep.subr.bf16.mxu0 0
    %207 = vmatpush1.bf16.msra.mxu0 %v184
    %208 = vmatprep.subr.bf16.mxu0 0
    %209 = vmatpush1.bf16.msra.mxu0 %v185
    %210 = vmatprep.subr.bf16.mxu0 0
    %211 = vmatpush1.bf16.msra.mxu0 0
    %212 = vmatprep.subr.bf16.mxu0 0
    %213 = vmatpush1.bf16.msra.mxu0 0
    %214 = vmatprep.subr.bf16.mxu0 0
    %215 = vmatpush1.bf16.msra.mxu0 0
    %216 = vmatprep.subr.bf16.mxu0 0
    %217 = vmatpush1.bf16.msra.mxu0 0
    %218 = vmatprep.subr.bf16.mxu0 0
    %219 = vmatpush1.bf16.msra.mxu0 0
    %220 = vmatprep.subr.bf16.mxu0 0
    %221 = vmatpush1.bf16.msra.mxu0 0
    %222 = vmatprep.subr.bf16.mxu0 0
    %223 = vmatpush1.bf16.msra.mxu0 0
    %224 = vmatprep.subr.bf16.mxu0 0
    %225 = vmatpush1.bf16.msra.mxu0 0
    %226 = vmatprep.mubr.bf16.mxu0 0
    %227 = vmatmul.mubr.bf16.gmra.mrb[0].mxu0 %v122
    %v228 = vpop.f32.mrb[0].mxu0
    %v229 = vadd.f32 %v144, %v228
    %v230 = vpop.f32.mrb[0].mxu0
    %v231 = vpop.f32.mrb[0].mxu0
    %v232 = vadd.f32 %v144, %v231
    %v233 = vpop.f32.mrb[0].mxu0
    %234 = vdwg.mxu0
    %vm235 = vcmp.gt.f32.partialorder %v229, 0.0
    %vm236 = vcmp.gt.f32.partialorder %v232, 0.0
    %v237 = vmul.f32 %v229, 0.1
    %v238 = vmul.f32 %v232, 0.1
    %v239 = vsel %vm235, %v229, %v237
    %v240 = vsel %vm236, %v232, %v238
    %v241 = vpack.c.bf16 %v240, %v239
    %v242 = vld [vmem:[%s5] sm:$0xf]
    %v243 = vld [vmem:[%s5 + $0x4] sm:$0xf]
    %v244 = vld [vmem:[%s5 + $0x8] sm:$0xf]
    %v245 = vld [vmem:[%s5 + $0xc] sm:$0xf]
    %v246 = vld [vmem:[%s5 + $0x10] sm:$0xf]
    %v247 = vld [vmem:[%s5 + $0x14] sm:$0xf]
    %v248 = vld [vmem:[%s5 + $0x18] sm:$0xf]
    %v249 = vld [vmem:[%s5 + $0x1c] sm:$0xf]
    %v250 = vld [vmem:[%s5 + $0x20] sm:$0xf]
    %v251 = vld [vmem:[%s5 + $0x24] sm:$0xf]
    %v252 = vld [vmem:[%s5 + $0x28] sm:$0xf]
    %v253 = vld [vmem:[%s5 + $0x2c] sm:$0xf]
    %v254 = vld [vmem:[%s5 + $0x30] sm:$0xf]
    %v255 = vld [vmem:[%s5 + $0x34] sm:$0xf]
    %v256 = vld [vmem:[%s5 + $0x38] sm:$0xf]
    %v257 = vld [vmem:[%s5 + $0x3c] sm:$0xf]
    %v274 = vunpack.c.l.b16 %v242
    %v275 = vunpack.c.l.b16 %v243
    %v276 = vunpack.c.l.b16 %v244
    %v277 = vunpack.c.l.b16 %v245
    %v278 = vunpack.c.l.b16 %v246
    %v279 = vunpack.c.l.b16 %v247
    %v280 = vunpack.c.l.b16 %v248
    %v281 = vunpack.c.l.b16 %v249
    %v282 = vunpack.c.l.b16 %v250
    %v283 = vunpack.c.l.b16 %v251
    %v284 = vunpack.c.l.b16 %v252
    %v285 = vunpack.c.l.b16 %v253
    %v286 = vunpack.c.l.b16 %v254
    %v287 = vunpack.c.l.b16 %v255
    %v288 = vunpack.c.l.b16 %v256
    %v289 = vunpack.c.l.b16 %v257
    %v290 = vpack.c.b16 %v275, %v274
    %v291 = vpack.c.b16 %v277, %v276
    %v292 = vpack.c.b16 %v279, %v278
    %v293 = vpack.c.b16 %v281, %v280
    %v294 = vpack.c.b16 %v283, %v282
    %v295 = vpack.c.b16 %v285, %v284
    %v296 = vpack.c.b16 %v287, %v286
    %v297 = vpack.c.b16 %v289, %v288
    %306 = vmatprep.subr.bf16.mxu0 0
    %307 = vmatpush1.bf16.msra.mxu0 %v290
    %308 = vmatprep.subr.bf16.mxu0 0
    %309 = vmatpush1.bf16.msra.mxu0 %v291
    %310 = vmatprep.subr.bf16.mxu0 0
    %311 = vmatpush1.bf16.msra.mxu0 %v292
    %312 = vmatprep.subr.bf16.mxu0 0
    %313 = vmatpush1.bf16.msra.mxu0 %v293
    %314 = vmatprep.subr.bf16.mxu0 0
    %315 = vmatpush1.bf16.msra.mxu0 %v294
    %316 = vmatprep.subr.bf16.mxu0 0
    %317 = vmatpush1.bf16.msra.mxu0 %v295
    %318 = vmatprep.subr.bf16.mxu0 0
    %319 = vmatpush1.bf16.msra.mxu0 %v296
    %320 = vmatprep.subr.bf16.mxu0 0
    %321 = vmatpush1.bf16.msra.mxu0 %v297
    %322 = vmatprep.subr.bf16.mxu0 0
    %323 = vmatpush1.bf16.msra.mxu0 0
    %324 = vmatprep.subr.bf16.mxu0 0
    %325 = vmatpush1.bf16.msra.mxu0 0
    %326 = vmatprep.subr.bf16.mxu0 0
    %327 = vmatpush1.bf16.msra.mxu0 0
    %328 = vmatprep.subr.bf16.mxu0 0
    %329 = vmatpush1.bf16.msra.mxu0 0
    %330 = vmatprep.subr.bf16.mxu0 0
    %331 = vmatpush1.bf16.msra.mxu0 0
    %332 = vmatprep.subr.bf16.mxu0 0
    %333 = vmatpush1.bf16.msra.mxu0 0
    %334 = vmatprep.subr.bf16.mxu0 0
    %335 = vmatpush1.bf16.msra.mxu0 0
    %336 = vmatprep.subr.bf16.mxu0 0
    %337 = vmatpush1.bf16.msra.mxu0 0
    %338 = vmatprep.mubr.bf16.mxu0 0
    %339 = vmatmul.mubr.bf16.gmra.mrb[0].mxu0 %v241
    %v340 = vpop.f32.mrb[0].mxu0
    %v341 = vadd.f32 0.0, %v340
    %v342 = vpop.f32.mrb[0].mxu0
    %v343 = vpop.f32.mrb[0].mxu0
    %v344 = vadd.f32 0.0, %v343
    %v345 = vpop.f32.mrb[0].mxu0
    %346 = vdwg.mxu0
    %v347 = vld [vmem:[%s6] sm:$0x1]
    %v349 = vlaneseq
    %v350 = vshrl.u32 %v349, 7
    %v351 = vsub.s32 0, %v350
    %v352 = vrot.slane %v347, %v351
    %v354 = vadd.f32 %v341, %v352
    %v355 = vadd.f32 %v344, %v352
    %v356 = vtanh.pop %v354
    %v357 = vtanh.pop %v355
    %vm358 = vcmask 15360
    %359 = vst.msk [vmem:[%s7] sm:$0xff] %vm358, %v356
    %360 = vst.msk [vmem:[%s7 + $0x8] sm:$0xff] %vm358, %v357
    // Predicated region
    $region34: #{tpu_custom_call.1} parent=1 // pred_check
      _
    $region35: #{tpu_custom_call.1} parent=1 // pred_check_branch
      %362 = sbr.rel (0) target = $region37
    $region36: #{tpu_custom_call.1} parent=1 // pred_region
      _
    $region37: #{tpu_custom_call.1} parent=1 // pred_fallthru
      _
    // Predicated region
    $region38: #{tpu_custom_call.1} parent=1 // pred_check
      _
    $region39: #{tpu_custom_call.1} parent=1 // pred_check_branch
      %364 = sbr.rel (0) target = $region41
    $region40: #{tpu_custom_call.1} parent=1 // pred_region
      _
    $region41: #{tpu_custom_call.1} parent=1 // pred_fallthru
      _
    %365 = vsyncpa [#allocation3], 1

</llo_original>
